<compile_context>
chip_gen: v5e
topology: v5e:2x2
jax: 0.10.0
libtpu: 0.0.40
codegen_flags: <defaults>
</compile_context>

<pallas_src>
import numpy as np
import jax
import jax.numpy as jnp
from jax import lax
from jax.experimental import pallas as pl
from jax.experimental.pallas import tpu as pltpu

LANE = 128


def _round_up(x, m):
    return (x + m - 1) // m * m


def _choose_th(Ho, Wo):
    """Output rows per M tile: target ~256 matmul rows, divide Ho, keep sublanes aligned."""
    if Wo % 8 != 0:
        return Ho                      # block 2nd-minor must equal full dim if not 8-aligned
    target = max(1, 256 // Wo)
    for th in range(min(target, Ho), 0, -1):
        if Ho % th == 0 and (th * Wo) % 8 == 0:
            return th
    return Ho


# -----------------------------------------------------------------------------
# Generic stride-1 square-kernel conv (+ folded-BN bias + ReLU) Pallas kernel.
#
#   rp : (N, Hp, Wo, kw*C)  bf16   kx-direction row patches (Hp = Ho + kh - 1)
#   w  : (kh, kw*C, CoutP)  bf16   BN-folded weights, Cout zero-padded to 128 lanes
#   b  : (CoutP,)           f32    BN-folded bias (zero in the padded lanes)
#   out: (N, Ho*Wo, CoutP)  out_dtype   (padded channels are exactly 0 after ReLU)
#
# Grid = (N, Ho//TH, kh).  Each step does one (TH*Wo, kw*C) x (kw*C, CoutP) MXU matmul
# on a ky-shifted slice of the resident row-patch slab and accumulates into a f32 VMEM
# scratch; bias + ReLU + downcast happen once on the last ky step.
# -----------------------------------------------------------------------------
def _conv_bn_relu(rp, w, b, Ho, *, out_dtype=jnp.bfloat16):
    N, Hp, Wo, kwC = rp.shape
    KH, kwC2, CoutP = w.shape
    assert kwC2 == kwC and Hp == Ho + KH - 1 and b.shape == (CoutP,)

    TH = _choose_th(Ho, Wo)
    T = Ho // TH
    Mblk = TH * Wo

    def kernel(rp_ref, w_ref, b_ref, o_ref, acc_ref):
        t = pl.program_id(1)
        ky = pl.program_id(2)

        @pl.when(ky == 0)
        def _init():
            acc_ref[...] = jnp.zeros_like(acc_ref)

        # Output rows [t*TH, t*TH+TH) need row-patch rows [t*TH+ky, t*TH+ky+TH).
        lhs = rp_ref[pl.ds(t * TH + ky, TH), :, :].reshape(Mblk, kwC)
        acc_ref[...] += jnp.dot(lhs, w_ref[ky], preferred_element_type=jnp.float32)

        @pl.when(ky == pl.num_programs(2) - 1)
        def _finalize():
            o_ref[...] = jnp.maximum(acc_ref[...] + b_ref[...], 0.0).astype(o_ref.dtype)

    out_bytes = 2 if out_dtype == jnp.bfloat16 else 4
    cost = pl.CostEstimate(
        flops=2 * N * Ho * Wo * KH * kwC * CoutP,
        transcendentals=0,
        bytes_accessed=rp.size * 2 + w.size * 2 + CoutP * 4
        + N * Ho * Wo * CoutP * out_bytes,
    )

    return pl.pallas_call(
        kernel,
        out_shape=jax.ShapeDtypeStruct((N, Ho * Wo, CoutP), out_dtype),
        grid_spec=pltpu.PrefetchScalarGridSpec(
            num_scalar_prefetch=0,
            grid=(N, T, KH),
            in_specs=[
                # Per-image row-patch slab: index depends only on n -> DMA'd once per
                # image, resident in VMEM across all (t, ky) steps of that image.
                pl.BlockSpec((None, Hp, Wo, kwC), lambda n, t, ky: (n, 0, 0, 0)),
                # Folded weights / bias: constant index map -> fetched once per grid.
                pl.BlockSpec((KH, kwC, CoutP), lambda n, t, ky: (0, 0, 0)),
                pl.BlockSpec((1, CoutP), lambda n, t, ky: (0, 0)),
            ],
            out_specs=pl.BlockSpec((None, Mblk, CoutP), lambda n, t, ky: (n, t, 0)),
            scratch_shapes=[pltpu.VMEM((Mblk, CoutP), jnp.float32)],
        ),
        compiler_params=pltpu.CompilerParams(
            dimension_semantics=("parallel", "parallel", "arbitrary")),
        cost_estimate=cost,
    )(rp, w, b.reshape(1, CoutP).astype(jnp.float32))


# -----------------------------------------------------------------------------
# Plain-JAX wrapper glue: layout, kx-only row patches, BN folding.
# -----------------------------------------------------------------------------
def _im2col_kx(xp, kw):
    """kx-only patch tensor: (N,Hp,Wp,C) -> (N,Hp,Wo,kw*C), K ordered (kx, c)."""
    N, Hp, Wp, C = xp.shape
    Wo = Wp - kw + 1
    cols = jnp.stack([xp[:, :, kx:kx + Wo, :] for kx in range(kw)], axis=3)  # (N,Hp,Wo,kw,C)
    return cols.reshape(N, Hp, Wo, kw * C)


def _fold_bn(w_hwio, conv_bias, gamma, beta, mean, var, eps=1e-5):
    """Fold eval-mode BatchNorm into the preceding conv's weights and bias."""
    scale = gamma / jnp.sqrt(var + eps)                     # (Cout,)
    return w_hwio * scale, scale * (conv_bias - mean) + beta


def narrow_forward(x_nchw, w1f, b1, w2f, b2):
    """Forward pass of `Narrow`.  x: NCHW f32; w*f: BN-folded HWIO weights; b*: folded bias."""
    N, Cin, H, W = x_nchw.shape
    kh1, kw1, _, Cout = w1f.shape
    kh2, kw2, _, _ = w2f.shape
    assert H + 2 >= kh1 and W + 2 >= kw1, "31x31 conv with padding=1 needs H,W >= 29"
    CoutP = _round_up(Cout, LANE)                            # lane-dense output channels

    x = jnp.transpose(x_nchw, (0, 2, 3, 1)).astype(jnp.bfloat16)   # NHWC, bf16 MXU inputs

    # ---- conv1 (31x31, pad=1) + BN1 + ReLU ---------------------------------------------
    xp1 = jnp.pad(x, ((0, 0), (1, 1), (1, 1), (0, 0)))
    H1, W1 = H + 2 - kh1 + 1, W + 2 - kw1 + 1
    rp1 = _im2col_kx(xp1, kw1)                               # (N, H+2, W1, 31*Cin)
    w1m = jnp.pad(w1f.reshape(kh1, kw1 * Cin, Cout),
                  ((0, 0), (0, 0), (0, CoutP - Cout))).astype(jnp.bfloat16)
    b1p = jnp.pad(b1, (0, CoutP - Cout))
    h1 = _conv_bn_relu(rp1, w1m, b1p, H1, out_dtype=jnp.bfloat16)   # (N, H1*W1, CoutP) bf16

    # ---- conv2 (3x3, pad=1) + BN2 + ReLU -----------------------------------------------
    # Slice back to the real Cout (K2 = 9*Cout, not 9*128); keep the bf16 interface.
    h1 = h1[:, :, :Cout].reshape(N, H1, W1, Cout)
    xp2 = jnp.pad(h1, ((0, 0), (1, 1), (1, 1), (0, 0)))
    rp2 = _im2col_kx(xp2, kw2)                               # (N, H1+2, W1, 3*Cout)
    w2m = jnp.pad(w2f.reshape(kh2, kw2 * Cout, Cout),
                  ((0, 0), (0, 0), (0, CoutP - Cout))).astype(jnp.bfloat16)
    b2p = jnp.pad(b2, (0, CoutP - Cout))
    h2 = _conv_bn_relu(rp2, w2m, b2p, H1, out_dtype=jnp.float32)    # (N, H1*W1, CoutP) f32

    out = h2[:, :, :Cout].reshape(N, H1, W1, Cout)
    return jnp.transpose(out, (0, 3, 1, 2))                  # back to NCHW


def _reference(x_nchw, w1f, b1, w2f, b2):
    """lax reference with the same inference precision policy (bf16 MXU inputs, f32 accum)."""
    dn = ("NHWC", "HWIO", "NHWC")
    x = jnp.transpose(x_nchw, (0, 2, 3, 1))
    h = lax.conv_general_dilated(x.astype(jnp.bfloat16), w1f.astype(jnp.bfloat16),
                                 (1, 1), [(1, 1), (1, 1)], dimension_numbers=dn,
                                 preferred_element_type=jnp.float32)
    h = jnp.maximum(h + b1.reshape(1, 1, 1, -1), 0.0)
    h = lax.conv_general_dilated(h.astype(jnp.bfloat16), w2f.astype(jnp.bfloat16),
                                 (1, 1), [(1, 1), (1, 1)], dimension_numbers=dn,
                                 preferred_element_type=jnp.float32)
    h = jnp.maximum(h + b2.reshape(1, 1, 1, -1), 0.0)
    return jnp.transpose(h, (0, 3, 1, 2))


if __name__ == "__main__":
    # The 31x31 conv with padding=1 requires spatial >= 29, so use 36x36 -> 8x8 feature
    # maps.  N=2, in_ch=4, out_ch=8.
    N, Cin, Cout, H, W = 2, 4, 8, 36, 36
    key = jax.random.PRNGKey(0)
    ks = jax.random.split(key, 9)

    x = jax.random.normal(ks[0], (N, Cin, H, W), jnp.float32)

    # Conv weights (HWIO) + biases, deterministic.
    w1 = 0.05 * jax.random.normal(ks[1], (31, 31, Cin, Cout), jnp.float32)
    cb1 = 0.05 * jax.random.normal(ks[2], (Cout,), jnp.float32)
    w2 = 0.1 * jax.random.normal(ks[3], (3, 3, Cout, Cout), jnp.float32)
    cb2 = 0.05 * jax.random.normal(ks[4], (Cout,), jnp.float32)

    # BatchNorm (eval mode) parameters, deterministic.
    # TODO(synk): train-mode BN (batch statistics) not implemented; eval-mode running stats used.
    g1 = 1.0 + 0.1 * jax.random.normal(ks[5], (Cout,), jnp.float32)
    be1 = 0.1 * jax.random.normal(ks[6], (Cout,), jnp.float32)
    m1 = 0.05 * jnp.arange(Cout, dtype=jnp.float32)
    v1 = 1.0 + 0.02 * jnp.arange(Cout, dtype=jnp.float32)
    g2 = 1.0 + 0.1 * jax.random.normal(ks[7], (Cout,), jnp.float32)
    be2 = 0.1 * jax.random.normal(ks[8], (Cout,), jnp.float32)
    m2 = -0.03 * jnp.arange(Cout, dtype=jnp.float32)
    v2 = 1.0 + 0.01 * jnp.arange(Cout, dtype=jnp.float32)

    w1f, b1 = _fold_bn(w1, cb1, g1, be1, m1, v1)
    w2f, b2 = _fold_bn(w2, cb2, g2, be2, m2, v2)

    out = jax.jit(narrow_forward)(x, w1f, b1, w2f, b2)
    out = jax.block_until_ready(out)
    assert out.shape == (N, Cout, H - 28, W - 28)

    ref = _reference(x, w1f, b1, w2f, b2)
    max_err = np.max(np.abs(np.asarray(out) - np.asarray(ref)))
    assert np.allclose(np.asarray(out), np.asarray(ref), rtol=1e-2, atol=1e-2), max_err

    print("KERNEL_OK")
</pallas_src>

<mosaic_0001>
module attributes {stable_mosaic.version = 11 : i64} {
  func.func @kernel(%arg0: i32, %arg1: i32, %arg2: i32, %arg3: memref<1x38x8x124xbf16, #tpu.memory_space<vmem>>, %arg4: memref<31x124x128xbf16, #tpu.memory_space<vmem>>, %arg5: memref<1x128xf32, #tpu.memory_space<vmem>>, %arg6: memref<1x64x128xbf16, #tpu.memory_space<vmem>>, %arg7: memref<64x128xf32, #tpu.memory_space<vmem>>) attributes {dimension_semantics = [#tpu.dimension_semantics<parallel>, #tpu.dimension_semantics<parallel>, #tpu.dimension_semantics<arbitrary>], iteration_bounds = array<i64: 2, 1, 31>, scalar_prefetch = 0 : i64, scratch_operands = 1 : i64, tpu.core_type = #tpu.core_type<tc>, window_params = [{transform_indices = @transform_0, window_bounds = array<i64: 1, 38, 8, 124>}, {pipeline_mode = #tpu.pipeline_mode<synchronous>, transform_indices = @transform_1, window_bounds = array<i64: 31, 124, 128>}, {pipeline_mode = #tpu.pipeline_mode<synchronous>, transform_indices = @transform_2, window_bounds = array<i64: 1, 128>}, {transform_indices = @transform_3, window_bounds = array<i64: 1, 64, 128>}]} {
    %c0_i32 = arith.constant 0 : i32
    %0 = arith.cmpi eq, %arg2, %c0_i32 : i32
    %1 = arith.extui %0 : i1 to i32
    %c0_i32_0 = arith.constant 0 : i32
    %2 = arith.cmpi ne, %1, %c0_i32_0 : i32
    scf.if %2 {
      %cst_10 = arith.constant 0.000000e+00 : f32
      %19 = vector.broadcast %cst_10 : f32 to vector<64x128xf32>
      %c0_11 = arith.constant 0 : index
      %c0_12 = arith.constant 0 : index
      %20 = vector.load %arg7[%c0_11, %c0_12] : memref<64x128xf32, #tpu.memory_space<vmem>>, vector<64x128xf32>
      tpu.vector_store %arg7[%c0_11, %c0_12], %19 {strides = array<i32>} : memref<64x128xf32, #tpu.memory_space<vmem>>, vector<64x128xf32>,
    } else {
    }
    %c8_i32 = arith.constant 8 : i32
    %3 = arith.muli %arg1, %c8_i32 : i32
    %4 = arith.addi %3, %arg2 : i32
    %c0 = arith.constant 0 : index
    %5 = arith.index_cast %4 : i32 to index
    %c0_1 = arith.constant 0 : index
    %c0_2 = arith.constant 0 : index
    %6 = vector.load %arg3[%c0, %5, %c0_1, %c0_2] : memref<1x38x8x124xbf16, #tpu.memory_space<vmem>>, vector<1x8x8x124xbf16>
    %7 = vector.shape_cast %6 : vector<1x8x8x124xbf16> to vector<8x8x124xbf16>
    %8 = vector.shape_cast %7 : vector<8x8x124xbf16> to vector<64x124xbf16>
    %c0_3 = arith.constant 0 : index
    %c0_4 = arith.constant 0 : index
    %9 = vector.load %arg7[%c0_3, %c0_4] : memref<64x128xf32, #tpu.memory_space<vmem>>, vector<64x128xf32>
    %10 = arith.index_cast %arg2 : i32 to index
    %c0_5 = arith.constant 0 : index
    %c0_6 = arith.constant 0 : index
    %11 = vector.load %arg4[%10, %c0_5, %c0_6] : memref<31x124x128xbf16, #tpu.memory_space<vmem>>, vector<1x124x128xbf16>
    %12 = vector.shape_cast %11 : vector<1x124x128xbf16> to vector<124x128xbf16>
    %cst = arith.constant dense<0.000000e+00> : vector<64x128xf32>
    %13 = tpu.matmul %8, %12, %cst {dimension_numbers = #tpu.dot_dimension_numbers<[1], [0], [0], [1], [0, 0, 1, 1], [], []>} : vector<64x124xbf16>, vector<124x128xbf16>, vector<64x128xf32> -> vector<64x128xf32>
    %14 = arith.addf %9, %13 : vector<64x128xf32>
    %c0_7 = arith.constant 0 : index
    %c0_8 = arith.constant 0 : index
    %15 = vector.load %arg7[%c0_7, %c0_8] : memref<64x128xf32, #tpu.memory_space<vmem>>, vector<64x128xf32>
    tpu.vector_store %arg7[%c0_7, %c0_8], %14 {strides = array<i32>} : memref<64x128xf32, #tpu.memory_space<vmem>>, vector<64x128xf32>,
    %c30_i32 = arith.constant 30 : i32
    %16 = arith.cmpi eq, %arg2, %c30_i32 : i32
    %17 = arith.extui %16 : i1 to i32
    %c0_i32_9 = arith.constant 0 : i32
    %18 = arith.cmpi ne, %17, %c0_i32_9 : i32
    scf.if %18 {
      %c0_10 = arith.constant 0 : index
      %c0_11 = arith.constant 0 : index
      %19 = vector.load %arg7[%c0_10, %c0_11] : memref<64x128xf32, #tpu.memory_space<vmem>>, vector<64x128xf32>
      %c0_12 = arith.constant 0 : index
      %c0_13 = arith.constant 0 : index
      %20 = vector.load %arg5[%c0_12, %c0_13] : memref<1x128xf32, #tpu.memory_space<vmem>>, vector<1x128xf32>
      %21 = vector.broadcast %20 : vector<1x128xf32> to vector<64x128xf32>
      %22 = arith.addf %19, %21 : vector<64x128xf32>
      %cst_14 = arith.constant 0.000000e+00 : f32
      %23 = vector.broadcast %cst_14 : f32 to vector<64x128xf32>
      %24 = arith.maximumf %22, %23 : vector<64x128xf32>
      %25 = arith.truncf %24 : vector<64x128xf32> to vector<64x128xbf16>
      %c0_15 = arith.constant 0 : index
      %c0_16 = arith.constant 0 : index
      %c0_17 = arith.constant 0 : index
      %26 = vector.load %arg6[%c0_15, %c0_16, %c0_17] : memref<1x64x128xbf16, #tpu.memory_space<vmem>>, vector<1x64x128xbf16>
      %27 = vector.shape_cast %26 : vector<1x64x128xbf16> to vector<64x128xbf16>
      %28 = vector.shape_cast %25 : vector<64x128xbf16> to vector<1x64x128xbf16>
      tpu.vector_store %arg6[%c0_15, %c0_16, %c0_17], %28 {strides = array<i32>} : memref<1x64x128xbf16, #tpu.memory_space<vmem>>, vector<1x64x128xbf16>,
    } else {
    }
    return
  }
  func.func @transform_0(%arg0: i32, %arg1: i32, %arg2: i32) -> (i32, i32, i32, i32) {
    %c0_i32 = arith.constant 0 : i32
    %c0_i32_0 = arith.constant 0 : i32
    %c0_i32_1 = arith.constant 0 : i32
    %c0_i32_2 = arith.constant 0 : i32
    return %arg0, %c0_i32, %c0_i32_0, %c0_i32_1 : i32, i32, i32, i32
  }
  func.func @transform_1(%arg0: i32, %arg1: i32, %arg2: i32) -> (i32, i32, i32) {
    %c0_i32 = arith.constant 0 : i32
    %c0_i32_0 = arith.constant 0 : i32
    %c0_i32_1 = arith.constant 0 : i32
    %c0_i32_2 = arith.constant 0 : i32
    return %c0_i32, %c0_i32_0, %c0_i32_1 : i32, i32, i32
  }
  func.func @transform_2(%arg0: i32, %arg1: i32, %arg2: i32) -> (i32, i32) {
    %c0_i32 = arith.constant 0 : i32
    %c0_i32_0 = arith.constant 0 : i32
    %c0_i32_1 = arith.constant 0 : i32
    return %c0_i32, %c0_i32_0 : i32, i32
  }
  func.func @transform_3(%arg0: i32, %arg1: i32, %arg2: i32) -> (i32, i32, i32) {
    %c0_i32 = arith.constant 0 : i32
    %c0_i32_0 = arith.constant 0 : i32
    return %arg0, %arg1, %c0_i32 : i32, i32, i32
  }
}

module attributes {stable_mosaic.version = 11 : i64} {
  func.func @kernel(%arg0: i32, %arg1: i32, %arg2: i32, %arg3: memref<1x10x8x24xbf16, #tpu.memory_space<vmem>>, %arg4: memref<3x24x128xbf16, #tpu.memory_space<vmem>>, %arg5: memref<1x128xf32, #tpu.memory_space<vmem>>, %arg6: memref<1x64x128xf32, #tpu.memory_space<vmem>>, %arg7: memref<64x128xf32, #tpu.memory_space<vmem>>) attributes {dimension_semantics = [#tpu.dimension_semantics<parallel>, #tpu.dimension_semantics<parallel>, #tpu.dimension_semantics<arbitrary>], iteration_bounds = array<i64: 2, 1, 3>, scalar_prefetch = 0 : i64, scratch_operands = 1 : i64, tpu.core_type = #tpu.core_type<tc>, window_params = [{transform_indices = @transform_0, window_bounds = array<i64: 1, 10, 8, 24>}, {pipeline_mode = #tpu.pipeline_mode<synchronous>, transform_indices = @transform_1, window_bounds = array<i64: 3, 24, 128>}, {pipeline_mode = #tpu.pipeline_mode<synchronous>, transform_indices = @transform_2, window_bounds = array<i64: 1, 128>}, {transform_indices = @transform_3, window_bounds = array<i64: 1, 64, 128>}]} {
    %c0_i32 = arith.constant 0 : i32
    %0 = arith.cmpi eq, %arg2, %c0_i32 : i32
    %1 = arith.extui %0 : i1 to i32
    %c0_i32_0 = arith.constant 0 : i32
    %2 = arith.cmpi ne, %1, %c0_i32_0 : i32
    scf.if %2 {
      %cst_10 = arith.constant 0.000000e+00 : f32
      %19 = vector.broadcast %cst_10 : f32 to vector<64x128xf32>
      %c0_11 = arith.constant 0 : index
      %c0_12 = arith.constant 0 : index
      %20 = vector.load %arg7[%c0_11, %c0_12] : memref<64x128xf32, #tpu.memory_space<vmem>>, vector<64x128xf32>
      tpu.vector_store %arg7[%c0_11, %c0_12], %19 {strides = array<i32>} : memref<64x128xf32, #tpu.memory_space<vmem>>, vector<64x128xf32>,
    } else {
    }
    %c8_i32 = arith.constant 8 : i32
    %3 = arith.muli %arg1, %c8_i32 : i32
    %4 = arith.addi %3, %arg2 : i32
    %c0 = arith.constant 0 : index
    %5 = arith.index_cast %4 : i32 to index
    %c0_1 = arith.constant 0 : index
    %c0_2 = arith.constant 0 : index
    %6 = vector.load %arg3[%c0, %5, %c0_1, %c0_2] : memref<1x10x8x24xbf16, #tpu.memory_space<vmem>>, vector<1x8x8x24xbf16>
    %7 = vector.shape_cast %6 : vector<1x8x8x24xbf16> to vector<8x8x24xbf16>
    %8 = vector.shape_cast %7 : vector<8x8x24xbf16> to vector<64x24xbf16>
    %c0_3 = arith.constant 0 : index
    %c0_4 = arith.constant 0 : index
    %9 = vector.load %arg7[%c0_3, %c0_4] : memref<64x128xf32, #tpu.memory_space<vmem>>, vector<64x128xf32>
    %10 = arith.index_cast %arg2 : i32 to index
    %c0_5 = arith.constant 0 : index
    %c0_6 = arith.constant 0 : index
    %11 = vector.load %arg4[%10, %c0_5, %c0_6] : memref<3x24x128xbf16, #tpu.memory_space<vmem>>, vector<1x24x128xbf16>
    %12 = vector.shape_cast %11 : vector<1x24x128xbf16> to vector<24x128xbf16>
    %cst = arith.constant dense<0.000000e+00> : vector<64x128xf32>
    %13 = tpu.matmul %8, %12, %cst {dimension_numbers = #tpu.dot_dimension_numbers<[1], [0], [0], [1], [0, 0, 1, 1], [], []>} : vector<64x24xbf16>, vector<24x128xbf16>, vector<64x128xf32> -> vector<64x128xf32>
    %14 = arith.addf %9, %13 : vector<64x128xf32>
    %c0_7 = arith.constant 0 : index
    %c0_8 = arith.constant 0 : index
    %15 = vector.load %arg7[%c0_7, %c0_8] : memref<64x128xf32, #tpu.memory_space<vmem>>, vector<64x128xf32>
    tpu.vector_store %arg7[%c0_7, %c0_8], %14 {strides = array<i32>} : memref<64x128xf32, #tpu.memory_space<vmem>>, vector<64x128xf32>,
    %c2_i32 = arith.constant 2 : i32
    %16 = arith.cmpi eq, %arg2, %c2_i32 : i32
    %17 = arith.extui %16 : i1 to i32
    %c0_i32_9 = arith.constant 0 : i32
    %18 = arith.cmpi ne, %17, %c0_i32_9 : i32
    scf.if %18 {
      %c0_10 = arith.constant 0 : index
      %c0_11 = arith.constant 0 : index
      %19 = vector.load %arg7[%c0_10, %c0_11] : memref<64x128xf32, #tpu.memory_space<vmem>>, vector<64x128xf32>
      %c0_12 = arith.constant 0 : index
      %c0_13 = arith.constant 0 : index
      %20 = vector.load %arg5[%c0_12, %c0_13] : memref<1x128xf32, #tpu.memory_space<vmem>>, vector<1x128xf32>
      %21 = vector.broadcast %20 : vector<1x128xf32> to vector<64x128xf32>
      %22 = arith.addf %19, %21 : vector<64x128xf32>
      %cst_14 = arith.constant 0.000000e+00 : f32
      %23 = vector.broadcast %cst_14 : f32 to vector<64x128xf32>
      %24 = arith.maximumf %22, %23 : vector<64x128xf32>
      %c0_15 = arith.constant 0 : index
      %c0_16 = arith.constant 0 : index
      %c0_17 = arith.constant 0 : index
      %25 = vector.load %arg6[%c0_15, %c0_16, %c0_17] : memref<1x64x128xf32, #tpu.memory_space<vmem>>, vector<1x64x128xf32>
      %26 = vector.shape_cast %25 : vector<1x64x128xf32> to vector<64x128xf32>
      %27 = vector.shape_cast %24 : vector<64x128xf32> to vector<1x64x128xf32>
      tpu.vector_store %arg6[%c0_15, %c0_16, %c0_17], %27 {strides = array<i32>} : memref<1x64x128xf32, #tpu.memory_space<vmem>>, vector<1x64x128xf32>,
    } else {
    }
    return
  }
  func.func @transform_0(%arg0: i32, %arg1: i32, %arg2: i32) -> (i32, i32, i32, i32) {
    %c0_i32 = arith.constant 0 : i32
    %c0_i32_0 = arith.constant 0 : i32
    %c0_i32_1 = arith.constant 0 : i32
    %c0_i32_2 = arith.constant 0 : i32
    return %arg0, %c0_i32, %c0_i32_0, %c0_i32_1 : i32, i32, i32, i32
  }
  func.func @transform_1(%arg0: i32, %arg1: i32, %arg2: i32) -> (i32, i32, i32) {
    %c0_i32 = arith.constant 0 : i32
    %c0_i32_0 = arith.constant 0 : i32
    %c0_i32_1 = arith.constant 0 : i32
    %c0_i32_2 = arith.constant 0 : i32
    return %c0_i32, %c0_i32_0, %c0_i32_1 : i32, i32, i32
  }
  func.func @transform_2(%arg0: i32, %arg1: i32, %arg2: i32) -> (i32, i32) {
    %c0_i32 = arith.constant 0 : i32
    %c0_i32_0 = arith.constant 0 : i32
    %c0_i32_1 = arith.constant 0 : i32
    return %c0_i32, %c0_i32_0 : i32, i32
  }
  func.func @transform_3(%arg0: i32, %arg1: i32, %arg2: i32) -> (i32, i32, i32) {
    %c0_i32 = arith.constant 0 : i32
    %c0_i32_0 = arith.constant 0 : i32
    return %arg0, %arg1, %c0_i32 : i32, i32, i32
  }
}

</mosaic_0001>

<llo_original>
// kernel: narrow_forward.2
$region0: #{narrow_forward.2}
  #allocation0 [shape = 'u32[]', space=smem, size = 0x4, offset = 0x4, fixed_abs, tag = 'smem constant byte address 0x4 - core index']
  #allocation1 [shape = 'u32[72,128]{1,0:T(1,128)}', space=vmem, size = 0x9000, scoped, tag = 'internal scratch']
  #allocation2 [shape = 'f32[64,128]{1,0:T(8,128)}', space=vmem, size = 0x8000, scoped, tag = 'scratch operand']
  %s0 = inlined_call_operand.vmem [shape: bf16[2,38,8,124], index: 0, kind: input, shape index: {}]
  %s1 = inlined_call_operand.vmem [shape: bf16[31,124,128], index: 1, kind: input, shape index: {}]
  %s2 = inlined_call_operand.vmem [shape: f32[1,128], index: 2, kind: input, shape index: {}]
  %s3 = inlined_call_operand.vmem [shape: bf16[2,64,128], index: 3, kind: output, shape index: {}]
  %s4 = sld [smem:[#allocation0]]
  $region53: #{narrow_forward.2} parent=0
    _
  %s6 = ssub.s32 1, %s4
  %s7 = scalar_select 0, %s6, %s4
  loop: start=0, step=1, limit=64
  $region2: #{narrow_forward.2} parent=0 // loop_pre_header
    _
  $region3: #{narrow_forward.2} parent=0 // loop_header
    %s9 = sphi 0, %s13
    %p10 = scmp.ge.s32.totalorder %s9, 64
    %s16 = sphi 0, %s35
    %s17 = sphi 0, %s31
    %s18 = sphi 0, %s27
    %s19 = sphi 0, %s16
    %s20 = sphi 0, %s17
    %s21 = sphi 0, %s18
    %s22 = sphi 0, %s19
    %s23 = sphi 0, %s20
    %s24 = sphi 0, %s21
    %s38 = sphi 0, %s40
    %s41 = sphi 0, %s38
    %s42 = sphi 0, %s41
    %s58 = sphi 0, %s42
    %s62 = sphi 0, %s62
    %s64 = sphi 0, %s62
    %s65 = sphi 0, %s64
    %s79 = sphi 0, %s65
    %s83 = sphi 0, %s83
    %s85 = sphi 0, %s83
    %s86 = sphi 0, %s85
    %s100 = sphi 0, %s86
    %s108 = sphi 0, %s110
    %s111 = sphi 0, %s108
    %s112 = sphi 0, %s111
    %s128 = sphi 0, %s112
  $region4: #{narrow_forward.2} parent=0 // loop_header_branch
    %12 = sbr.rel (%p10) target = $region8
  $region5: #{narrow_forward.2} parent=0 // loop_body
    %s14 = ssub.s32 %s9, 1
    %s15 = ssub.s32 %s9, 2
    %s25 = sadd.s32 1, %s18
    %p26 = scmp.ge.s32.totalorder %s25, 31
    %s27 = scalar_select %p26, 0, %s25
    %s28 = sadd.s32 1, %s17
    %s29 = scalar_select %p26, %s28, %s17
    %p30 = scmp.ge.s32.totalorder %s29, 1
    %s31 = scalar_select %p30, 0, %s29
    %s32 = sadd.s32 1, %s16
    %s33 = scalar_select %p30, %s32, %s16
    %p34 = scmp.ge.s32.totalorder %s33, 2
    %s35 = scalar_select %p34, 0, %s33
    %s36 = ssub.s32 %s16, %s35
    %p37 = scmp.eq.s32.totalorder %s36, 0
    %s39 = sadd.s32 %s38, 1
    %s40 = scalar_select %p37, %s38, %s39
    %p43 = pneg %p37
    %p44 = scmp.eq.s32.totalorder %s9, 61
    %p45 = por %p43, %p44
    %p46 = scmp.ne.s32.totalorder %s38, %s41
    %p47 = scmp.eq.s32.totalorder %s9, 0
    %p48 = por %p46, %p47
    %p49 = scmp.ne.s32.totalorder %s38, %s41
    %p50 = scmp.eq.s32.totalorder %s14, 61
    %p51 = por %p49, %p50
    %p52 = scmp.ne.s32.totalorder %s41, %s42
    %p53 = scmp.eq.s32.totalorder %s14, 0
    %p54 = por %p52, %p53
    %p55 = scmp.ne.s32.totalorder %s41, %s42
    %p56 = scmp.eq.s32.totalorder %s15, 61
    %p57 = por %p55, %p56
    %p59 = scmp.ne.s32.totalorder %s42, %s58
    %p60 = scmp.eq.s32.totalorder %s15, 0
    %p61 = por %p59, %p60
    %s63 = sadd.s32 %s62, 1
    %p66 = scmp.eq.s32.totalorder %s9, 61
    %p67 = scmp.ne.s32.totalorder %s62, %s64
    %p68 = scmp.eq.s32.totalorder %s9, 0
    %p69 = por %p67, %p68
    %p70 = scmp.ne.s32.totalorder %s62, %s64
    %p71 = scmp.eq.s32.totalorder %s14, 61
    %p72 = por %p70, %p71
    %p73 = scmp.ne.s32.totalorder %s64, %s65
    %p74 = scmp.eq.s32.totalorder %s14, 0
    %p75 = por %p73, %p74
    %p76 = scmp.ne.s32.totalorder %s64, %s65
    %p77 = scmp.eq.s32.totalorder %s15, 61
    %p78 = por %p76, %p77
    %p80 = scmp.ne.s32.totalorder %s65, %s79
    %p81 = scmp.eq.s32.totalorder %s15, 0
    %p82 = por %p80, %p81
    %s84 = sadd.s32 %s83, 1
    %p87 = scmp.eq.s32.totalorder %s9, 61
    %p88 = scmp.ne.s32.totalorder %s83, %s85
    %p89 = scmp.eq.s32.totalorder %s9, 0
    %p90 = por %p88, %p89
    %p91 = scmp.ne.s32.totalorder %s83, %s85
    %p92 = scmp.eq.s32.totalorder %s14, 61
    %p93 = por %p91, %p92
    %p94 = scmp.ne.s32.totalorder %s85, %s86
    %p95 = scmp.eq.s32.totalorder %s14, 0
    %p96 = por %p94, %p95
    %p97 = scmp.ne.s32.totalorder %s85, %s86
    %p98 = scmp.eq.s32.totalorder %s15, 61
    %p99 = por %p97, %p98
    %p101 = scmp.ne.s32.totalorder %s86, %s100
    %p102 = scmp.eq.s32.totalorder %s15, 0
    %p103 = por %p101, %p102
    %s104 = ssub.s32 %s16, %s35
    %s105 = ssub.s32 %s17, %s31
    %s106 = sor.u32 %s104, %s105
    %p107 = scmp.eq.s32.totalorder %s106, 0
    %s109 = sadd.s32 %s108, 1
    %s110 = scalar_select %p107, %s108, %s109
    %p113 = pneg %p107
    %p114 = scmp.eq.s32.totalorder %s9, 61
    %p115 = por %p113, %p114
    %p116 = scmp.ne.s32.totalorder %s108, %s111
    %p117 = scmp.eq.s32.totalorder %s9, 0
    %p118 = por %p116, %p117
    %p119 = scmp.ne.s32.totalorder %s108, %s111
    %p120 = scmp.eq.s32.totalorder %s14, 61
    %p121 = por %p119, %p120
    %p122 = scmp.ne.s32.totalorder %s111, %s112
    %p123 = scmp.eq.s32.totalorder %s14, 0
    %p124 = por %p122, %p123
    %p125 = scmp.ne.s32.totalorder %s111, %s112
    %p126 = scmp.eq.s32.totalorder %s15, 61
    %p127 = por %p125, %p126
    %p129 = scmp.ne.s32.totalorder %s112, %s128
    %p130 = scmp.eq.s32.totalorder %s15, 0
    %p131 = por %p129, %p130
    %p132 = scmp.le.s32.totalorder 1, %s9
    %p133 = scmp.lt.s32.totalorder %s9, 63
    %p134 = pnand %p132, %p133
    %p135 = pneg %p134
    // Predicated region
    $region9: #{narrow_forward.2} parent=5 // pred_check
      _
    $region10: #{narrow_forward.2} parent=5 // pred_check_branch
      %137 = sbr.rel (%p134) target = $region12
    $region11: #{narrow_forward.2} parent=5 // pred_region
      %s138 = ssub.s32 %s9, 1
      // Predicated region
      $region13: #{narrow_forward.2} parent=11 // pred_check
        %p139 = pneg %p75
      $region14: #{narrow_forward.2} parent=11 // pred_check_branch
        %141 = sbr.rel (%p139) target = $region16
      $region15: #{narrow_forward.2} parent=11 // pred_region
        _
      $region16: #{narrow_forward.2} parent=11 // pred_fallthru
        _
      // Predicated region
      $region17: #{narrow_forward.2} parent=11 // pred_check
        %p142 = pneg %p96
      $region18: #{narrow_forward.2} parent=11 // pred_check_branch
        %144 = sbr.rel (%p142) target = $region20
      $region19: #{narrow_forward.2} parent=11 // pred_region
        _
      $region20: #{narrow_forward.2} parent=11 // pred_fallthru
        _
    $region12: #{narrow_forward.2} parent=5 // pred_fallthru
      _
    %p145 = scmp.lt.s32.totalorder %s9, 62
    // Predicated region
    $region21: #{narrow_forward.2} parent=5 // pred_check
      %p146 = pneg %p145
    $region22: #{narrow_forward.2} parent=5 // pred_check_branch
      %148 = sbr.rel (%p146) target = $region24
    $region23: #{narrow_forward.2} parent=5 // pred_region
      // Predicated region
      $region25: #{narrow_forward.2} parent=23 // pred_check
        %p149 = pneg %p48
      $region26: #{narrow_forward.2} parent=23 // pred_check_branch
        %151 = sbr.rel (%p149) target = $region28
      $region27: #{narrow_forward.2} parent=23 // pred_region
        %p152 = scmp.lt.s32.totalorder %s16, 1
        %s153 = scalar_select %p152, %s16, 1
        %s154 = smul.addr %s153, 38
        %s155 = smul.addr %s154, 4
        %s156 = scalar_lea.vmem %s0, %s155
      $region28: #{narrow_forward.2} parent=23 // pred_fallthru
        _
    $region24: #{narrow_forward.2} parent=5 // pred_fallthru
      _
    %p157 = scmp.le.s32.totalorder 1, %s9
    %p158 = scmp.lt.s32.totalorder %s9, 63
    %p159 = pnand %p157, %p158
    %p160 = pneg %p159
    // Predicated region
    $region29: #{narrow_forward.2} parent=5 // pred_check
      _
    $region30: #{narrow_forward.2} parent=5 // pred_check_branch
      %162 = sbr.rel (%p159) target = $region32
    $region31: #{narrow_forward.2} parent=5 // pred_region
      %s163 = ssub.s32 %s9, 1
      %p164 = scmp.lt.s32.totalorder %s19, 1
      %s165 = scalar_select %p164, %s19, 1
      %s166 = smul.addr %s165, 38
      %s167 = smul.addr %s166, 4
      %s168 = scalar_lea.vmem %s0, %s167
      %p169 = pneg %p54
      %p170 = pneg %p51
      %p171 = pneg %p75
      %p172 = pneg %p72
      %p173 = pneg %p96
      %p174 = pneg %p93
      %p175 = pneg %p124
      %p176 = pneg %p121
      %s177 = smul.u32 8, %s20
      %p178 = scmp.lt.s32.totalorder %s19, 1
      %s179 = scalar_select %p178, %s19, 1
      %p180 = scmp.lt.s32.totalorder %s177, 7
      %s181 = scalar_select %p180, %s177, 7
      %s182 = smul.addr %s179, 8
      %s183 = sadd.s32 %s181, %s182
      %s184 = smul.addr %s183, 4
      %s185 = scalar_lea.vmem %s3, %s184
      %p186 = scmp.lt.s32.totalorder %s19, 1
      %s187 = scalar_select %p186, %s19, 1
      %s188 = smul.addr %s187, 38
      %s189 = smul.addr %s188, 4
      %s190 = scalar_lea.vmem %s0, %s189
      %s191 = smul.u32 8, %s20
      %p192 = scmp.lt.s32.totalorder %s19, 1
      %s193 = scalar_select %p192, %s19, 1
      %p194 = scmp.lt.s32.totalorder %s191, 7
      %s195 = scalar_select %p194, %s191, 7
      %s196 = smul.addr %s193, 8
      %s197 = sadd.s32 %s195, %s196
      %s198 = smul.addr %s197, 4
      %s199 = scalar_lea.vmem %s3, %s198
      %s200 = smul.u32 8, %s20
      %p201 = scmp.eq.s32.totalorder %s21, 0
      // Predicated region
      $region33: #{narrow_forward.2} parent=31 // pred_check
        %p202 = pneg %p201
      $region34: #{narrow_forward.2} parent=31 // pred_check_branch
        %204 = sbr.rel (%p202) target = $region36
      $region35: #{narrow_forward.2} parent=31 // pred_region
        %205 = vst [vmem:[#allocation2] sm:$0xff] 0.0
        %206 = vst [vmem:[#allocation2 + $0x8] sm:$0xff] 0.0
        %207 = vst [vmem:[#allocation2 + $0x10] sm:$0xff] 0.0
        %208 = vst [vmem:[#allocation2 + $0x18] sm:$0xff] 0.0
        %209 = vst [vmem:[#allocation2 + $0x20] sm:$0xff] 0.0
        %210 = vst [vmem:[#allocation2 + $0x28] sm:$0xff] 0.0
        %211 = vst [vmem:[#allocation2 + $0x30] sm:$0xff] 0.0
        %212 = vst [vmem:[#allocation2 + $0x38] sm:$0xff] 0.0
      $region36: #{narrow_forward.2} parent=31 // pred_fallthru
        _
      %s213 = smul.u32 %s20, 8
      %s214 = sadd.s32 %s213, %s21
      %s215 = smul.addr %s214, 4
      %s216 = scalar_lea.vmem %s190, %s215
      %v217 = vld [vmem:[%s216] sm:$0xf]
      %v218 = vld [vmem:[%s216 + $0x4] sm:$0xf]
      %v219 = vld [vmem:[%s216 + $0x8] sm:$0xf]
      %v220 = vld [vmem:[%s216 + $0xc] sm:$0xf]
      %v221 = vld [vmem:[%s216 + $0x10] sm:$0xf]
      %v222 = vld [vmem:[%s216 + $0x14] sm:$0xf]
      %v223 = vld [vmem:[%s216 + $0x18] sm:$0xf]
      %v224 = vld [vmem:[%s216 + $0x1c] sm:$0xf]
      %v225 = vld [vmem:[#allocation2] sm:$0xff]
      %v226 = vld [vmem:[#allocation2 + $0x8] sm:$0xff]
      %v227 = vld [vmem:[#allocation2 + $0x10] sm:$0xff]
      %v228 = vld [vmem:[#allocation2 + $0x18] sm:$0xff]
      %v229 = vld [vmem:[#allocation2 + $0x20] sm:$0xff]
      %v230 = vld [vmem:[#allocation2 + $0x28] sm:$0xff]
      %v231 = vld [vmem:[#allocation2 + $0x30] sm:$0xff]
      %v232 = vld [vmem:[#allocation2 + $0x38] sm:$0xff]
      %s233 = smul.u32 %s21, 16
      %s234 = smul.addr %s233, 4
      %s235 = scalar_lea.vmem %s1, %s234
      %v236 = vld [vmem:[%s235] sm:$0xf]
      %v237 = vld [vmem:[%s235 + $0x4] sm:$0xf]
      %v238 = vld [vmem:[%s235 + $0x8] sm:$0xf]
      %v239 = vld [vmem:[%s235 + $0xc] sm:$0xf]
      %v240 = vld [vmem:[%s235 + $0x10] sm:$0xf]
      %v241 = vld [vmem:[%s235 + $0x14] sm:$0xf]
      %v242 = vld [vmem:[%s235 + $0x18] sm:$0xf]
      %v243 = vld [vmem:[%s235 + $0x1c] sm:$0xf]
      %v244 = vld [vmem:[%s235 + $0x20] sm:$0xf]
      %v245 = vld [vmem:[%s235 + $0x24] sm:$0xf]
      %v246 = vld [vmem:[%s235 + $0x28] sm:$0xf]
      %v247 = vld [vmem:[%s235 + $0x2c] sm:$0xf]
      %v248 = vld [vmem:[%s235 + $0x30] sm:$0xf]
      %v249 = vld [vmem:[%s235 + $0x34] sm:$0xf]
      %v250 = vld [vmem:[%s235 + $0x38] sm:$0xf]
      %v251 = vld [vmem:[%s235 + $0x3c] sm:$0x3]
      %v260 = vunpack.c.l.b16 %v217
      %v261 = vunpack.c.l.b16 %v218
      %v262 = vunpack.c.l.b16 %v219
      %v263 = vunpack.c.l.b16 %v220
      %v264 = vunpack.c.l.b16 %v221
      %v265 = vunpack.c.l.b16 %v222
      %v266 = vunpack.c.l.b16 %v223
      %v267 = vunpack.c.l.b16 %v224
      %v268 = vpack.c.b16 %v261, %v260
      %v269 = vpack.c.b16 %v263, %v262
      %v270 = vpack.c.b16 %v265, %v264
      %v271 = vpack.c.b16 %v267, %v266
      %v288 = vunpack.c.l.b16 %v236
      %v289 = vunpack.c.l.b16 %v237
      %v290 = vunpack.c.l.b16 %v238
      %v291 = vunpack.c.l.b16 %v239
      %v292 = vunpack.c.l.b16 %v240
      %v293 = vunpack.c.l.b16 %v241
      %v294 = vunpack.c.l.b16 %v242
      %v295 = vunpack.c.l.b16 %v243
      %v296 = vunpack.c.l.b16 %v244
      %v297 = vunpack.c.l.b16 %v245
      %v298 = vunpack.c.l.b16 %v246
      %v299 = vunpack.c.l.b16 %v247
      %v300 = vunpack.c.l.b16 %v248
      %v301 = vunpack.c.l.b16 %v249
      %v302 = vunpack.c.l.b16 %v250
      %v303 = vunpack.c.l.b16 %v251
      %v304 = vpack.c.b16 %v289, %v288
      %v305 = vpack.c.b16 %v291, %v290
      %v306 = vpack.c.b16 %v293, %v292
      %v307 = vpack.c.b16 %v295, %v294
      %v308 = vpack.c.b16 %v297, %v296
      %v309 = vpack.c.b16 %v299, %v298
      %v310 = vpack.c.b16 %v301, %v300
      %v311 = vpack.c.b16 %v303, %v302
      %vm319 = vcmask 1014784
      %v321 = vsel %vm319, %v268, 0
      %v324 = vsel %vm319, %v269, 0
      %v327 = vsel %vm319, %v270, 0
      %v330 = vsel %vm319, %v271, 0
      %vm332 = vcmask 1045504
      %v334 = vsel %vm332, %v311, 0
      %336 = vmatpush.bf16.msra.mxu0 %v334
      %337 = vmatpush.bf16.msra.mxu0 %v310
      %338 = vmatpush.bf16.msra.mxu0 %v309
      %339 = vmatpush.bf16.msra.mxu0 %v308
      %340 = vmatpush.bf16.msra.mxu0 %v307
      %341 = vmatpush.bf16.msra.mxu0 %v306
      %342 = vmatpush.bf16.msra.mxu0 %v305
      %343 = vmatpush.bf16.msra.mxu0 %v304
      %344 = vmatmul.bf16.gmra.mxu0 %v321
      %v345 = vpop.f32.mrf.mxu0
      %v346 = vadd.f32 0.0, %v345
      %v347 = vpop.f32.mrf.mxu0
      %v348 = vadd.f32 0.0, %v347
      %349 = vmatmul.bf16.gmra.mxu0 %v324
      %v350 = vpop.f32.mrf.mxu0
      %v351 = vadd.f32 0.0, %v350
      %v352 = vpop.f32.mrf.mxu0
      %v353 = vadd.f32 0.0, %v352
      %354 = vmatmul.bf16.gmra.mxu0 %v327
      %v355 = vpop.f32.mrf.mxu0
      %v356 = vadd.f32 0.0, %v355
      %v357 = vpop.f32.mrf.mxu0
      %v358 = vadd.f32 0.0, %v357
      %359 = vmatmul.bf16.gmra.mxu0 %v330
      %v360 = vpop.f32.mrf.mxu0
      %v361 = vadd.f32 0.0, %v360
      %v362 = vpop.f32.mrf.mxu0
      %v363 = vadd.f32 0.0, %v362
      %364 = vdwg.mxu0
      %v365 = vadd.f32 %v225, %v346
      %v366 = vadd.f32 %v226, %v348
      %v367 = vadd.f32 %v227, %v351
      %v368 = vadd.f32 %v228, %v353
      %v369 = vadd.f32 %v229, %v356
      %v370 = vadd.f32 %v230, %v358
      %v371 = vadd.f32 %v231, %v361
      %v372 = vadd.f32 %v232, %v363
      %373 = vst [vmem:[#allocation2] sm:$0xff] %v365
      %374 = vst [vmem:[#allocation2 + $0x8] sm:$0xff] %v366
      %375 = vst [vmem:[#allocation2 + $0x10] sm:$0xff] %v367
      %376 = vst [vmem:[#allocation2 + $0x18] sm:$0xff] %v368
      %377 = vst [vmem:[#allocation2 + $0x20] sm:$0xff] %v369
      %378 = vst [vmem:[#allocation2 + $0x28] sm:$0xff] %v370
      %379 = vst [vmem:[#allocation2 + $0x30] sm:$0xff] %v371
      %380 = vst [vmem:[#allocation2 + $0x38] sm:$0xff] %v372
      %p381 = scmp.eq.s32.totalorder %s21, 30
      // Predicated region
      $region37: #{narrow_forward.2} parent=31 // pred_check
        %p382 = pneg %p381
      $region38: #{narrow_forward.2} parent=31 // pred_check_branch
        %384 = sbr.rel (%p382) target = $region40
      $region39: #{narrow_forward.2} parent=31 // pred_region
        %v385 = vld [vmem:[#allocation2] sm:$0xff]
        %v386 = vld [vmem:[#allocation2 + $0x8] sm:$0xff]
        %v387 = vld [vmem:[#allocation2 + $0x10] sm:$0xff]
        %v388 = vld [vmem:[#allocation2 + $0x18] sm:$0xff]
        %v389 = vld [vmem:[#allocation2 + $0x20] sm:$0xff]
        %v390 = vld [vmem:[#allocation2 + $0x28] sm:$0xff]
        %v391 = vld [vmem:[#allocation2 + $0x30] sm:$0xff]
        %v392 = vld [vmem:[#allocation2 + $0x38] sm:$0xff]
        %v393 = vld [vmem:[%s2] sm:$0x1]
        %v395 = vperm.slane %v393, 0
        %v397 = vadd.f32 %v385, %v395
        %v398 = vadd.f32 %v386, %v395
        %v399 = vadd.f32 %v387, %v395
        %v400 = vadd.f32 %v388, %v395
        %v401 = vadd.f32 %v389, %v395
        %v402 = vadd.f32 %v390, %v395
        %v403 = vadd.f32 %v391, %v395
        %v404 = vadd.f32 %v392, %v395
        %v405 = vmax.f32 %v397, 0.0
        %v406 = vmax.f32 %v398, 0.0
        %v407 = vmax.f32 %v399, 0.0
        %v408 = vmax.f32 %v400, 0.0
        %v409 = vmax.f32 %v401, 0.0
        %v410 = vmax.f32 %v402, 0.0
        %v411 = vmax.f32 %v403, 0.0
        %v412 = vmax.f32 %v404, 0.0
        %v413 = vpack.c.bf16 %v405, %v405
        %v414 = vpack.c.bf16 %v406, %v406
        %v415 = vpack.c.bf16 %v407, %v407
        %v416 = vpack.c.bf16 %v408, %v408
        %v417 = vpack.c.bf16 %v409, %v409
        %v418 = vpack.c.bf16 %v410, %v410
        %v419 = vpack.c.bf16 %v411, %v411
        %v420 = vpack.c.bf16 %v412, %v412
        %421 = vst [vmem:[%s199] sm:$0xf] %v413
        %422 = vst [vmem:[%s199 + $0x4] sm:$0xf] %v414
        %423 = vst [vmem:[%s199 + $0x8] sm:$0xf] %v415
        %424 = vst [vmem:[%s199 + $0xc] sm:$0xf] %v416
        %425 = vst [vmem:[%s199 + $0x10] sm:$0xf] %v417
        %426 = vst [vmem:[%s199 + $0x14] sm:$0xf] %v418
        %427 = vst [vmem:[%s199 + $0x18] sm:$0xf] %v419
        %428 = vst [vmem:[%s199 + $0x1c] sm:$0xf] %v420
      $region40: #{narrow_forward.2} parent=31 // pred_fallthru
        _
      %s429 = smul.u32 8, %s20
      %p430 = scmp.lt.s32.totalorder %s19, 1
      %s431 = scalar_select %p430, %s19, 1
      %p432 = scmp.lt.s32.totalorder %s429, 7
      %s433 = scalar_select %p432, %s429, 7
      %s434 = smul.addr %s431, 8
      %s435 = sadd.s32 %s433, %s434
      %s436 = smul.addr %s435, 4
      %s437 = scalar_lea.vmem %s3, %s436
      // Predicated region
      $region41: #{narrow_forward.2} parent=31 // pred_check
        %p438 = pneg %p121
      $region42: #{narrow_forward.2} parent=31 // pred_check_branch
        %440 = sbr.rel (%p438) target = $region44
      $region43: #{narrow_forward.2} parent=31 // pred_region
        %s441 = smul.u32 8, %s20
      $region44: #{narrow_forward.2} parent=31 // pred_fallthru
        _
    $region32: #{narrow_forward.2} parent=5 // pred_fallthru
      _
    %p442 = scmp.le.s32.totalorder 2, %s9
    // Predicated region
    $region45: #{narrow_forward.2} parent=5 // pred_check
      %p443 = pneg %p442
    $region46: #{narrow_forward.2} parent=5 // pred_check_branch
      %445 = sbr.rel (%p443) target = $region48
    $region47: #{narrow_forward.2} parent=5 // pred_region
      %s446 = ssub.s32 %s9, 2
      // Predicated region
      $region49: #{narrow_forward.2} parent=47 // pred_check
        %p447 = pneg %p127
      $region50: #{narrow_forward.2} parent=47 // pred_check_branch
        %449 = sbr.rel (%p447) target = $region52
      $region51: #{narrow_forward.2} parent=47 // pred_region
        %s450 = smul.u32 8, %s23
        %p451 = scmp.lt.s32.totalorder %s22, 1
        %s452 = scalar_select %p451, %s22, 1
        %p453 = scmp.lt.s32.totalorder %s450, 7
        %s454 = scalar_select %p453, %s450, 7
        %s455 = smul.addr %s452, 8
        %s456 = sadd.s32 %s454, %s455
        %s457 = smul.addr %s456, 4
        %s458 = scalar_lea.vmem %s3, %s457
      $region52: #{narrow_forward.2} parent=47 // pred_fallthru
        _
    $region48: #{narrow_forward.2} parent=5 // pred_fallthru
      _
  $region6: #{narrow_forward.2} parent=0 // loop_footer
    %s13 = sadd.s32 1, %s9
  $region7: #{narrow_forward.2} parent=0 // loop_footer_branch
    %8 = sbr.rel target = $region3
  $region8: #{narrow_forward.2} parent=0 // loop_exit
    _

// kernel: narrow_forward.3
$region0: #{narrow_forward.3}
  #allocation0 [shape = 'u32[]', space=smem, size = 0x4, offset = 0x4, fixed_abs, tag = 'smem constant byte address 0x4 - core index']
  #allocation1 [shape = 'u32[72,128]{1,0:T(1,128)}', space=vmem, size = 0x9000, scoped, tag = 'internal scratch']
  #allocation2 [shape = 'f32[64,128]{1,0:T(8,128)}', space=vmem, size = 0x8000, scoped, tag = 'scratch operand']
  %s0 = inlined_call_operand.vmem [shape: bf16[2,10,8,24], index: 0, kind: input, shape index: {}]
  %s1 = inlined_call_operand.vmem [shape: bf16[3,24,128], index: 1, kind: input, shape index: {}]
  %s2 = inlined_call_operand.vmem [shape: f32[1,128], index: 2, kind: input, shape index: {}]
  %s3 = inlined_call_operand.vmem [shape: f32[2,64,128], index: 3, kind: output, shape index: {}]
  %s4 = sld [smem:[#allocation0]]
  $region53: #{narrow_forward.3} parent=0
    _
  %s6 = ssub.s32 1, %s4
  %s7 = scalar_select 0, %s6, %s4
  loop: start=0, step=1, limit=8
  $region2: #{narrow_forward.3} parent=0 // loop_pre_header
    _
  $region3: #{narrow_forward.3} parent=0 // loop_header
    %s9 = sphi 0, %s13
    %p10 = scmp.ge.s32.totalorder %s9, 8
    %s16 = sphi 0, %s35
    %s17 = sphi 0, %s31
    %s18 = sphi 0, %s27
    %s19 = sphi 0, %s16
    %s20 = sphi 0, %s17
    %s21 = sphi 0, %s18
    %s22 = sphi 0, %s19
    %s23 = sphi 0, %s20
    %s24 = sphi 0, %s21
    %s38 = sphi 0, %s40
    %s41 = sphi 0, %s38
    %s42 = sphi 0, %s41
    %s58 = sphi 0, %s42
    %s62 = sphi 0, %s62
    %s64 = sphi 0, %s62
    %s65 = sphi 0, %s64
    %s79 = sphi 0, %s65
    %s83 = sphi 0, %s83
    %s85 = sphi 0, %s83
    %s86 = sphi 0, %s85
    %s100 = sphi 0, %s86
    %s108 = sphi 0, %s110
    %s111 = sphi 0, %s108
    %s112 = sphi 0, %s111
    %s128 = sphi 0, %s112
  $region4: #{narrow_forward.3} parent=0 // loop_header_branch
    %12 = sbr.rel (%p10) target = $region8
  $region5: #{narrow_forward.3} parent=0 // loop_body
    %s14 = ssub.s32 %s9, 1
    %s15 = ssub.s32 %s9, 2
    %s25 = sadd.s32 1, %s18
    %p26 = scmp.ge.s32.totalorder %s25, 3
    %s27 = scalar_select %p26, 0, %s25
    %s28 = sadd.s32 1, %s17
    %s29 = scalar_select %p26, %s28, %s17
    %p30 = scmp.ge.s32.totalorder %s29, 1
    %s31 = scalar_select %p30, 0, %s29
    %s32 = sadd.s32 1, %s16
    %s33 = scalar_select %p30, %s32, %s16
    %p34 = scmp.ge.s32.totalorder %s33, 2
    %s35 = scalar_select %p34, 0, %s33
    %s36 = ssub.s32 %s16, %s35
    %p37 = scmp.eq.s32.totalorder %s36, 0
    %s39 = sadd.s32 %s38, 1
    %s40 = scalar_select %p37, %s38, %s39
    %p43 = pneg %p37
    %p44 = scmp.eq.s32.totalorder %s9, 5
    %p45 = por %p43, %p44
    %p46 = scmp.ne.s32.totalorder %s38, %s41
    %p47 = scmp.eq.s32.totalorder %s9, 0
    %p48 = por %p46, %p47
    %p49 = scmp.ne.s32.totalorder %s38, %s41
    %p50 = scmp.eq.s32.totalorder %s14, 5
    %p51 = por %p49, %p50
    %p52 = scmp.ne.s32.totalorder %s41, %s42
    %p53 = scmp.eq.s32.totalorder %s14, 0
    %p54 = por %p52, %p53
    %p55 = scmp.ne.s32.totalorder %s41, %s42
    %p56 = scmp.eq.s32.totalorder %s15, 5
    %p57 = por %p55, %p56
    %p59 = scmp.ne.s32.totalorder %s42, %s58
    %p60 = scmp.eq.s32.totalorder %s15, 0
    %p61 = por %p59, %p60
    %s63 = sadd.s32 %s62, 1
    %p66 = scmp.eq.s32.totalorder %s9, 5
    %p67 = scmp.ne.s32.totalorder %s62, %s64
    %p68 = scmp.eq.s32.totalorder %s9, 0
    %p69 = por %p67, %p68
    %p70 = scmp.ne.s32.totalorder %s62, %s64
    %p71 = scmp.eq.s32.totalorder %s14, 5
    %p72 = por %p70, %p71
    %p73 = scmp.ne.s32.totalorder %s64, %s65
    %p74 = scmp.eq.s32.totalorder %s14, 0
    %p75 = por %p73, %p74
    %p76 = scmp.ne.s32.totalorder %s64, %s65
    %p77 = scmp.eq.s32.totalorder %s15, 5
    %p78 = por %p76, %p77
    %p80 = scmp.ne.s32.totalorder %s65, %s79
    %p81 = scmp.eq.s32.totalorder %s15, 0
    %p82 = por %p80, %p81
    %s84 = sadd.s32 %s83, 1
    %p87 = scmp.eq.s32.totalorder %s9, 5
    %p88 = scmp.ne.s32.totalorder %s83, %s85
    %p89 = scmp.eq.s32.totalorder %s9, 0
    %p90 = por %p88, %p89
    %p91 = scmp.ne.s32.totalorder %s83, %s85
    %p92 = scmp.eq.s32.totalorder %s14, 5
    %p93 = por %p91, %p92
    %p94 = scmp.ne.s32.totalorder %s85, %s86
    %p95 = scmp.eq.s32.totalorder %s14, 0
    %p96 = por %p94, %p95
    %p97 = scmp.ne.s32.totalorder %s85, %s86
    %p98 = scmp.eq.s32.totalorder %s15, 5
    %p99 = por %p97, %p98
    %p101 = scmp.ne.s32.totalorder %s86, %s100
    %p102 = scmp.eq.s32.totalorder %s15, 0
    %p103 = por %p101, %p102
    %s104 = ssub.s32 %s16, %s35
    %s105 = ssub.s32 %s17, %s31
    %s106 = sor.u32 %s104, %s105
    %p107 = scmp.eq.s32.totalorder %s106, 0
    %s109 = sadd.s32 %s108, 1
    %s110 = scalar_select %p107, %s108, %s109
    %p113 = pneg %p107
    %p114 = scmp.eq.s32.totalorder %s9, 5
    %p115 = por %p113, %p114
    %p116 = scmp.ne.s32.totalorder %s108, %s111
    %p117 = scmp.eq.s32.totalorder %s9, 0
    %p118 = por %p116, %p117
    %p119 = scmp.ne.s32.totalorder %s108, %s111
    %p120 = scmp.eq.s32.totalorder %s14, 5
    %p121 = por %p119, %p120
    %p122 = scmp.ne.s32.totalorder %s111, %s112
    %p123 = scmp.eq.s32.totalorder %s14, 0
    %p124 = por %p122, %p123
    %p125 = scmp.ne.s32.totalorder %s111, %s112
    %p126 = scmp.eq.s32.totalorder %s15, 5
    %p127 = por %p125, %p126
    %p129 = scmp.ne.s32.totalorder %s112, %s128
    %p130 = scmp.eq.s32.totalorder %s15, 0
    %p131 = por %p129, %p130
    %p132 = scmp.le.s32.totalorder 1, %s9
    %p133 = scmp.lt.s32.totalorder %s9, 7
    %p134 = pnand %p132, %p133
    %p135 = pneg %p134
    // Predicated region
    $region9: #{narrow_forward.3} parent=5 // pred_check
      _
    $region10: #{narrow_forward.3} parent=5 // pred_check_branch
      %137 = sbr.rel (%p134) target = $region12
    $region11: #{narrow_forward.3} parent=5 // pred_region
      %s138 = ssub.s32 %s9, 1
      // Predicated region
      $region13: #{narrow_forward.3} parent=11 // pred_check
        %p139 = pneg %p75
      $region14: #{narrow_forward.3} parent=11 // pred_check_branch
        %141 = sbr.rel (%p139) target = $region16
      $region15: #{narrow_forward.3} parent=11 // pred_region
        _
      $region16: #{narrow_forward.3} parent=11 // pred_fallthru
        _
      // Predicated region
      $region17: #{narrow_forward.3} parent=11 // pred_check
        %p142 = pneg %p96
      $region18: #{narrow_forward.3} parent=11 // pred_check_branch
        %144 = sbr.rel (%p142) target = $region20
      $region19: #{narrow_forward.3} parent=11 // pred_region
        _
      $region20: #{narrow_forward.3} parent=11 // pred_fallthru
        _
    $region12: #{narrow_forward.3} parent=5 // pred_fallthru
      _
    %p145 = scmp.lt.s32.totalorder %s9, 6
    // Predicated region
    $region21: #{narrow_forward.3} parent=5 // pred_check
      %p146 = pneg %p145
    $region22: #{narrow_forward.3} parent=5 // pred_check_branch
      %148 = sbr.rel (%p146) target = $region24
    $region23: #{narrow_forward.3} parent=5 // pred_region
      // Predicated region
      $region25: #{narrow_forward.3} parent=23 // pred_check
        %p149 = pneg %p48
      $region26: #{narrow_forward.3} parent=23 // pred_check_branch
        %151 = sbr.rel (%p149) target = $region28
      $region27: #{narrow_forward.3} parent=23 // pred_region
        %p152 = scmp.lt.s32.totalorder %s16, 1
        %s153 = scalar_select %p152, %s16, 1
        %s154 = smul.addr %s153, 10
        %s155 = smul.addr %s154, 4
        %s156 = scalar_lea.vmem %s0, %s155
      $region28: #{narrow_forward.3} parent=23 // pred_fallthru
        _
    $region24: #{narrow_forward.3} parent=5 // pred_fallthru
      _
    %p157 = scmp.le.s32.totalorder 1, %s9
    %p158 = scmp.lt.s32.totalorder %s9, 7
    %p159 = pnand %p157, %p158
    %p160 = pneg %p159
    // Predicated region
    $region29: #{narrow_forward.3} parent=5 // pred_check
      _
    $region30: #{narrow_forward.3} parent=5 // pred_check_branch
      %162 = sbr.rel (%p159) target = $region32
    $region31: #{narrow_forward.3} parent=5 // pred_region
      %s163 = ssub.s32 %s9, 1
      %p164 = scmp.lt.s32.totalorder %s19, 1
      %s165 = scalar_select %p164, %s19, 1
      %s166 = smul.addr %s165, 10
      %s167 = smul.addr %s166, 4
      %s168 = scalar_lea.vmem %s0, %s167
      %p169 = pneg %p54
      %p170 = pneg %p51
      %p171 = pneg %p75
      %p172 = pneg %p72
      %p173 = pneg %p96
      %p174 = pneg %p93
      %p175 = pneg %p124
      %p176 = pneg %p121
      %s177 = smul.u32 8, %s20
      %p178 = scmp.lt.s32.totalorder %s19, 1
      %s179 = scalar_select %p178, %s19, 1
      %p180 = scmp.lt.s32.totalorder %s177, 7
      %s181 = scalar_select %p180, %s177, 7
      %s182 = smul.addr %s179, 8
      %s183 = sadd.s32 %s181, %s182
      %s184 = smul.addr %s183, 8
      %s185 = scalar_lea.vmem %s3, %s184
      %p186 = scmp.lt.s32.totalorder %s19, 1
      %s187 = scalar_select %p186, %s19, 1
      %s188 = smul.addr %s187, 10
      %s189 = smul.addr %s188, 4
      %s190 = scalar_lea.vmem %s0, %s189
      %s191 = smul.u32 8, %s20
      %p192 = scmp.lt.s32.totalorder %s19, 1
      %s193 = scalar_select %p192, %s19, 1
      %p194 = scmp.lt.s32.totalorder %s191, 7
      %s195 = scalar_select %p194, %s191, 7
      %s196 = smul.addr %s193, 8
      %s197 = sadd.s32 %s195, %s196
      %s198 = smul.addr %s197, 8
      %s199 = scalar_lea.vmem %s3, %s198
      %s200 = smul.u32 8, %s20
      %p202 = scmp.eq.s32.totalorder %s21, 0
      // Predicated region
      $region33: #{narrow_forward.3} parent=31 // pred_check
        %p203 = pneg %p202
      $region34: #{narrow_forward.3} parent=31 // pred_check_branch
        %205 = sbr.rel (%p203) target = $region36
      $region35: #{narrow_forward.3} parent=31 // pred_region
        %206 = vst [vmem:[#allocation2] sm:$0xff] 0.0
        %207 = vst [vmem:[#allocation2 + $0x8] sm:$0xff] 0.0
        %208 = vst [vmem:[#allocation2 + $0x10] sm:$0xff] 0.0
        %209 = vst [vmem:[#allocation2 + $0x18] sm:$0xff] 0.0
        %210 = vst [vmem:[#allocation2 + $0x20] sm:$0xff] 0.0
        %211 = vst [vmem:[#allocation2 + $0x28] sm:$0xff] 0.0
        %212 = vst [vmem:[#allocation2 + $0x30] sm:$0xff] 0.0
        %213 = vst [vmem:[#allocation2 + $0x38] sm:$0xff] 0.0
      $region36: #{narrow_forward.3} parent=31 // pred_fallthru
        _
      %s214 = smul.u32 %s20, 8
      %s215 = sadd.s32 %s214, %s21
      %s216 = smul.addr %s215, 4
      %s217 = scalar_lea.vmem %s190, %s216
      %v218 = vld [vmem:[%s217] sm:$0xf]
      %v219 = vld [vmem:[%s217 + $0x4] sm:$0xf]
      %v220 = vld [vmem:[%s217 + $0x8] sm:$0xf]
      %v221 = vld [vmem:[%s217 + $0xc] sm:$0xf]
      %v222 = vld [vmem:[%s217 + $0x10] sm:$0xf]
      %v223 = vld [vmem:[%s217 + $0x14] sm:$0xf]
      %v224 = vld [vmem:[%s217 + $0x18] sm:$0xf]
      %v225 = vld [vmem:[%s217 + $0x1c] sm:$0xf]
      %v226 = vld [vmem:[#allocation2] sm:$0xff]
      %v227 = vld [vmem:[#allocation2 + $0x8] sm:$0xff]
      %v228 = vld [vmem:[#allocation2 + $0x10] sm:$0xff]
      %v229 = vld [vmem:[#allocation2 + $0x18] sm:$0xff]
      %v230 = vld [vmem:[#allocation2 + $0x20] sm:$0xff]
      %v231 = vld [vmem:[#allocation2 + $0x28] sm:$0xff]
      %v232 = vld [vmem:[#allocation2 + $0x30] sm:$0xff]
      %v233 = vld [vmem:[#allocation2 + $0x38] sm:$0xff]
      %s234 = smul.u32 %s21, 3
      %s235 = smul.addr %s234, 4
      %s236 = scalar_lea.vmem %s1, %s235
      %v237 = vld [vmem:[%s236] sm:$0xf]
      %v238 = vld [vmem:[%s236 + $0x4] sm:$0xf]
      %v239 = vld [vmem:[%s236 + $0x8] sm:$0xf]
      %v248 = vunpack.c.l.b16 %v218
      %v249 = vunpack.c.l.b16 %v219
      %v250 = vunpack.c.l.b16 %v220
      %v251 = vunpack.c.l.b16 %v221
      %v252 = vunpack.c.l.b16 %v222
      %v253 = vunpack.c.l.b16 %v223
      %v254 = vunpack.c.l.b16 %v224
      %v255 = vunpack.c.l.b16 %v225
      %v256 = vpack.c.b16 %v249, %v248
      %v257 = vpack.c.b16 %v251, %v250
      %v258 = vpack.c.b16 %v253, %v252
      %v259 = vpack.c.b16 %v255, %v254
      %v263 = vunpack.c.l.b16 %v237
      %v264 = vunpack.c.l.b16 %v238
      %v265 = vunpack.c.l.b16 %v239
      %v266 = vpack.c.b16 %v264, %v263
      %v267 = vpack.c.b16 %v265, %v265
      %vm269 = vcmask 195584
      %v271 = vsel %vm269, %v256, 0
      %v274 = vsel %vm269, %v257, 0
      %v277 = vsel %vm269, %v258, 0
      %v280 = vsel %vm269, %v259, 0
      %vm282 = vcmask 1043456
      %v284 = vsel %vm282, %v267, 0
      %286 = vmatpush.bf16.msra.mxu0 0
      %287 = vmatpush.bf16.msra.mxu0 0
      %288 = vmatpush.bf16.msra.mxu0 0
      %289 = vmatpush.bf16.msra.mxu0 0
      %290 = vmatpush.bf16.msra.mxu0 0
      %291 = vmatpush.bf16.msra.mxu0 0
      %292 = vmatpush.bf16.msra.mxu0 %v284
      %293 = vmatpush.bf16.msra.mxu0 %v266
      %294 = vmatmul.bf16.gmra.mxu0 %v271
      %v295 = vpop.f32.mrf.mxu0
      %v296 = vadd.f32 0.0, %v295
      %v297 = vpop.f32.mrf.mxu0
      %v298 = vadd.f32 0.0, %v297
      %299 = vmatmul.bf16.gmra.mxu0 %v274
      %v300 = vpop.f32.mrf.mxu0
      %v301 = vadd.f32 0.0, %v300
      %v302 = vpop.f32.mrf.mxu0
      %v303 = vadd.f32 0.0, %v302
      %304 = vmatmul.bf16.gmra.mxu0 %v277
      %v305 = vpop.f32.mrf.mxu0
      %v306 = vadd.f32 0.0, %v305
      %v307 = vpop.f32.mrf.mxu0
      %v308 = vadd.f32 0.0, %v307
      %309 = vmatmul.bf16.gmra.mxu0 %v280
      %v310 = vpop.f32.mrf.mxu0
      %v311 = vadd.f32 0.0, %v310
      %v312 = vpop.f32.mrf.mxu0
      %v313 = vadd.f32 0.0, %v312
      %314 = vdwg.mxu0
      %v315 = vadd.f32 %v226, %v296
      %v316 = vadd.f32 %v227, %v298
      %v317 = vadd.f32 %v228, %v301
      %v318 = vadd.f32 %v229, %v303
      %v319 = vadd.f32 %v230, %v306
      %v320 = vadd.f32 %v231, %v308
      %v321 = vadd.f32 %v232, %v311
      %v322 = vadd.f32 %v233, %v313
      %323 = vst [vmem:[#allocation2] sm:$0xff] %v315
      %324 = vst [vmem:[#allocation2 + $0x8] sm:$0xff] %v316
      %325 = vst [vmem:[#allocation2 + $0x10] sm:$0xff] %v317
      %326 = vst [vmem:[#allocation2 + $0x18] sm:$0xff] %v318
      %327 = vst [vmem:[#allocation2 + $0x20] sm:$0xff] %v319
      %328 = vst [vmem:[#allocation2 + $0x28] sm:$0xff] %v320
      %329 = vst [vmem:[#allocation2 + $0x30] sm:$0xff] %v321
      %330 = vst [vmem:[#allocation2 + $0x38] sm:$0xff] %v322
      %p331 = scmp.eq.s32.totalorder %s21, 2
      // Predicated region
      $region37: #{narrow_forward.3} parent=31 // pred_check
        %p332 = pneg %p331
      $region38: #{narrow_forward.3} parent=31 // pred_check_branch
        %334 = sbr.rel (%p332) target = $region40
      $region39: #{narrow_forward.3} parent=31 // pred_region
        %v335 = vld [vmem:[#allocation2] sm:$0xff]
        %v336 = vld [vmem:[#allocation2 + $0x8] sm:$0xff]
        %v337 = vld [vmem:[#allocation2 + $0x10] sm:$0xff]
        %v338 = vld [vmem:[#allocation2 + $0x18] sm:$0xff]
        %v339 = vld [vmem:[#allocation2 + $0x20] sm:$0xff]
        %v340 = vld [vmem:[#allocation2 + $0x28] sm:$0xff]
        %v341 = vld [vmem:[#allocation2 + $0x30] sm:$0xff]
        %v342 = vld [vmem:[#allocation2 + $0x38] sm:$0xff]
        %v343 = vld [vmem:[%s2] sm:$0x1]
        %v345 = vperm.slane %v343, 0
        %v347 = vadd.f32 %v335, %v345
        %v348 = vadd.f32 %v336, %v345
        %v349 = vadd.f32 %v337, %v345
        %v350 = vadd.f32 %v338, %v345
        %v351 = vadd.f32 %v339, %v345
        %v352 = vadd.f32 %v340, %v345
        %v353 = vadd.f32 %v341, %v345
        %v354 = vadd.f32 %v342, %v345
        %v355 = vmax.f32 %v347, 0.0
        %v356 = vmax.f32 %v348, 0.0
        %v357 = vmax.f32 %v349, 0.0
        %v358 = vmax.f32 %v350, 0.0
        %v359 = vmax.f32 %v351, 0.0
        %v360 = vmax.f32 %v352, 0.0
        %v361 = vmax.f32 %v353, 0.0
        %v362 = vmax.f32 %v354, 0.0
        %363 = vst [vmem:[%s199] sm:$0xff] %v355
        %364 = vst [vmem:[%s199 + $0x8] sm:$0xff] %v356
        %365 = vst [vmem:[%s199 + $0x10] sm:$0xff] %v357
        %366 = vst [vmem:[%s199 + $0x18] sm:$0xff] %v358
        %367 = vst [vmem:[%s199 + $0x20] sm:$0xff] %v359
        %368 = vst [vmem:[%s199 + $0x28] sm:$0xff] %v360
        %369 = vst [vmem:[%s199 + $0x30] sm:$0xff] %v361
        %370 = vst [vmem:[%s199 + $0x38] sm:$0xff] %v362
      $region40: #{narrow_forward.3} parent=31 // pred_fallthru
        _
      %s371 = smul.u32 8, %s20
      %p372 = scmp.lt.s32.totalorder %s19, 1
      %s373 = scalar_select %p372, %s19, 1
      %p374 = scmp.lt.s32.totalorder %s371, 7
      %s375 = scalar_select %p374, %s371, 7
      %s376 = smul.addr %s373, 8
      %s377 = sadd.s32 %s375, %s376
      %s378 = smul.addr %s377, 8
      %s379 = scalar_lea.vmem %s3, %s378
      // Predicated region
      $region41: #{narrow_forward.3} parent=31 // pred_check
        %p380 = pneg %p121
      $region42: #{narrow_forward.3} parent=31 // pred_check_branch
        %382 = sbr.rel (%p380) target = $region44
      $region43: #{narrow_forward.3} parent=31 // pred_region
        %s383 = smul.u32 8, %s20
      $region44: #{narrow_forward.3} parent=31 // pred_fallthru
        _
    $region32: #{narrow_forward.3} parent=5 // pred_fallthru
      _
    %p384 = scmp.le.s32.totalorder 2, %s9
    // Predicated region
    $region45: #{narrow_forward.3} parent=5 // pred_check
      %p385 = pneg %p384
    $region46: #{narrow_forward.3} parent=5 // pred_check_branch
      %387 = sbr.rel (%p385) target = $region48
    $region47: #{narrow_forward.3} parent=5 // pred_region
      %s388 = ssub.s32 %s9, 2
      // Predicated region
      $region49: #{narrow_forward.3} parent=47 // pred_check
        %p389 = pneg %p127
      $region50: #{narrow_forward.3} parent=47 // pred_check_branch
        %391 = sbr.rel (%p389) target = $region52
      $region51: #{narrow_forward.3} parent=47 // pred_region
        %s392 = smul.u32 8, %s23
        %p393 = scmp.lt.s32.totalorder %s22, 1
        %s394 = scalar_select %p393, %s22, 1
        %p395 = scmp.lt.s32.totalorder %s392, 7
        %s396 = scalar_select %p395, %s392, 7
        %s397 = smul.addr %s394, 8
        %s398 = sadd.s32 %s396, %s397
        %s399 = smul.addr %s398, 8
        %s400 = scalar_lea.vmem %s3, %s399
      $region52: #{narrow_forward.3} parent=47 // pred_fallthru
        _
    $region48: #{narrow_forward.3} parent=5 // pred_fallthru
      _
  $region6: #{narrow_forward.3} parent=0 // loop_footer
    %s13 = sadd.s32 1, %s9
  $region7: #{narrow_forward.3} parent=0 // loop_footer_branch
    %8 = sbr.rel target = $region3
  $region8: #{narrow_forward.3} parent=0 // loop_exit
    _

</llo_original>
